<compile_context>
chip_gen: v7x
topology: tpu7x:2x2x1
jax: 0.10.0
libtpu: 0.0.40
codegen_flags: <defaults>
</compile_context>

<pallas_src>
import jax
import jax.numpy as jnp
import numpy as np
from jax.experimental import pallas as pl
from jax.experimental.pallas import tpu as pltpu


_LANE = 128
_SUBLANE = 8


def _cdiv(a, b):
    return (a + b - 1) // b


def _vmem_params():
    """(per-call tile budget, vmem_limit_bytes) per TPU generation."""
    cap = None
    try:
        cap = getattr(pltpu.get_tpu_info(), "vmem_capacity_bytes", None)
    except Exception:  # noqa: BLE001 - be robust if the query is unavailable
        cap = None
    if cap is None:
        cap = 64 * 1024 * 1024  # conservative: v7x per-TensorCore VMEM
    if cap >= 100 * 1024 * 1024:
        # v5e / v6e: 128 MiB physical VMEM — use it.
        return 40 * 1024 * 1024, 96 * 1024 * 1024
    # v7x: 64 MiB per TensorCore — leave headroom.
    return 16 * 1024 * 1024, 48 * 1024 * 1024


def _softmax_kernel(x_ref, o_ref):
    # x_ref: (TILE_ROWS, V) block in VMEM; reduce over the lane (vocab) axis.
    x = x_ref[...].astype(jnp.float32)
    m = jnp.max(x, axis=-1, keepdims=True)
    e = jnp.exp(x - m)
    s = jnp.sum(e, axis=-1, keepdims=True)
    # Exact reciprocal: it only touches a (tile_rows, 1) column, essentially
    # free, and keeps the 1e-5 accuracy target.
    o_ref[...] = e * pl.reciprocal(s, approx=False)


def _log_softmax_kernel(x_ref, o_ref):
    x = x_ref[...].astype(jnp.float32)
    m = jnp.max(x, axis=-1, keepdims=True)
    shifted = x - m
    lse = jnp.log(jnp.sum(jnp.exp(shifted), axis=-1, keepdims=True))
    o_ref[...] = shifted - lse


def _choose_tile_rows(rows, v, in_bytes, tile_budget):
    """Largest row tile (multiple of 8) that stays VMEM-resident.

    Aims for >=4 grid steps (>=2 per v7x TensorCore) and an even step count
    when there is enough work; only the cdiv tail block may be ragged.
    """
    if rows <= _SUBLANE:
        # Single block whose row dim equals the full array dim (always legal).
        return rows

    # Double-buffered input + f32 output tiles, plus the in-kernel f32
    # temporaries (cast block + live exp/shifted block across the reductions).
    per_row_bytes = 2 * (in_bytes + 4) * v + 2 * 4 * v
    tile = tile_budget // per_row_bytes
    tile = int(tile // _SUBLANE) * _SUBLANE
    if tile < _SUBLANE:
        # TODO(synk): lane-blocked online-softmax fallback (2-D grid over
        # vocab chunks with running max/sum scratch) for vocabularies so wide
        # that even an 8-row tile does not fit VMEM on v7x.
        tile = _SUBLANE

    # Never exceed the 8-aligned row extent; only the tail block is ragged.
    tile = min(tile, (rows // _SUBLANE) * _SUBLANE)

    # v7x: >=4 grid steps so each of the two TensorCores pipelines >=2 blocks.
    min_steps = 4
    if rows >= min_steps * _SUBLANE:
        cap = max(_SUBLANE, (_cdiv(rows, min_steps) // _SUBLANE) * _SUBLANE)
        while cap > _SUBLANE and _cdiv(rows, cap) < min_steps:
            cap -= _SUBLANE
        tile = min(tile, cap)

    # Best-effort even step count for balanced megacore sharding.
    steps = _cdiv(rows, tile)
    if steps > 1 and steps % 2 == 1:
        alt = max(_SUBLANE, ((_cdiv(rows, steps + 1) + _SUBLANE - 1) // _SUBLANE) * _SUBLANE)
        if alt <= tile and _cdiv(rows, alt) % 2 == 0:
            tile = alt
    return tile


def _run_rowwise(kernel, logits_2d):
    rows, v = logits_2d.shape
    in_bytes = jnp.dtype(logits_2d.dtype).itemsize
    tile_budget, vmem_limit = _vmem_params()

    tile_rows = _choose_tile_rows(rows, v, in_bytes, tile_budget)
    grid = (_cdiv(rows, tile_rows),)

    cost = pl.CostEstimate(
        flops=5 * rows * v,
        transcendentals=rows * v,
        bytes_accessed=rows * v * (in_bytes + 4),
    )

    return pl.pallas_call(
        kernel,
        out_shape=jax.ShapeDtypeStruct((rows, v), jnp.float32),
        grid_spec=pltpu.PrefetchScalarGridSpec(
            num_scalar_prefetch=0,
            grid=grid,
            # Row block is a multiple of 8 (or == rows); last dim == full V,
            # so no HBM padding and no trailing slice are needed.
            in_specs=[pl.BlockSpec((tile_rows, v), lambda i: (i, 0))],
            out_specs=pl.BlockSpec((tile_rows, v), lambda i: (i, 0)),
        ),
        compiler_params=pltpu.CompilerParams(
            dimension_semantics=("parallel",),
            vmem_limit_bytes=vmem_limit,
        ),
        cost_estimate=cost,
    )(logits_2d)


class FairseqDecoderPallas:
    """JAX/Pallas analogue of the FairseqDecoder base class."""

    def __init__(self, dictionary=None):
        self.dictionary = dictionary
        self.onnx_trace = False
        self.adaptive_softmax = None  # base class never sets this

    # --- abstract in the reference module ---
    def extract_features(self, prev_output_tokens, encoder_out=None, **kw):
        raise NotImplementedError

    def output_layer(self, features, **kw):
        raise NotImplementedError

    def forward(self, prev_output_tokens, encoder_out=None, **kw):
        x, extra = self.extract_features(prev_output_tokens, encoder_out=encoder_out, **kw)
        x = self.output_layer(x)
        return (x, extra)

    # --- concrete: normalized probs over the vocab dim, in float32 ---
    def get_normalized_probs(self, net_output, log_probs, sample=None):
        # adaptive_softmax is always None in the base class; the scriptable
        # path reduces to (log_)softmax over the last dim in float32.
        logits = net_output[0]  # (batch, tgt_len, vocab)
        b, t, v = logits.shape
        flat = logits.reshape(b * t, v)
        kernel = _log_softmax_kernel if log_probs else _softmax_kernel
        out = _run_rowwise(kernel, flat)
        return out.reshape(b, t, v)

    def max_positions(self):
        return 1000000.0

    def upgrade_state_dict_named(self, state_dict, name):
        return state_dict

    def prepare_for_onnx_export_(self):
        self.onnx_trace = True


if __name__ == "__main__":
    key = jax.random.PRNGKey(0)
    dec = FairseqDecoderPallas(dictionary=None)

    # Case 1: lane/sublane-aligned shape (batch=2, tgt_len=8, vocab=128), bf16.
    B, T, V = 2, 8, 128
    logits = jax.random.normal(key, (B, T, V), dtype=jnp.bfloat16)

    probs = dec.get_normalized_probs((logits, None), log_probs=False)
    logp = dec.get_normalized_probs((logits, None), log_probs=True)
    jax.block_until_ready(probs)
    jax.block_until_ready(logp)

    ref_p = jax.nn.softmax(logits.astype(jnp.float32), axis=-1)
    ref_lp = jax.nn.log_softmax(logits.astype(jnp.float32), axis=-1)
    assert probs.dtype == jnp.float32 and logp.dtype == jnp.float32
    np.testing.assert_allclose(np.asarray(probs), np.asarray(ref_p), atol=1e-5, rtol=1e-5)
    np.testing.assert_allclose(np.asarray(logp), np.asarray(ref_lp), atol=1e-5, rtol=1e-5)
    np.testing.assert_allclose(np.asarray(probs.sum(-1)), 1.0, atol=1e-5, rtol=1e-5)

    # Case 2: non-aligned shape (ragged row tail + vocab not a multiple of 128), f32.
    B2, T2, V2 = 2, 7, 100
    logits2 = jax.random.normal(jax.random.PRNGKey(1), (B2, T2, V2), dtype=jnp.float32)

    probs2 = dec.get_normalized_probs((logits2, None), log_probs=False)
    logp2 = dec.get_normalized_probs((logits2, None), log_probs=True)
    jax.block_until_ready(probs2)
    jax.block_until_ready(logp2)

    ref_p2 = jax.nn.softmax(logits2, axis=-1)
    ref_lp2 = jax.nn.log_softmax(logits2, axis=-1)
    assert probs2.dtype == jnp.float32 and logp2.dtype == jnp.float32
    np.testing.assert_allclose(np.asarray(probs2), np.asarray(ref_p2), atol=1e-5, rtol=1e-5)
    np.testing.assert_allclose(np.asarray(logp2), np.asarray(ref_lp2), atol=1e-5, rtol=1e-5)
    np.testing.assert_allclose(np.asarray(probs2.sum(-1)), 1.0, atol=1e-5, rtol=1e-5)

    # Case 3: enough rows to exercise the multi-step (>=4, even) grid path.
    B3, T3, V3 = 4, 16, 256
    logits3 = jax.random.normal(jax.random.PRNGKey(2), (B3, T3, V3), dtype=jnp.bfloat16)
    probs3 = dec.get_normalized_probs((logits3, None), log_probs=False)
    jax.block_until_ready(probs3)
    ref_p3 = jax.nn.softmax(logits3.astype(jnp.float32), axis=-1)
    np.testing.assert_allclose(np.asarray(probs3), np.asarray(ref_p3), atol=1e-5, rtol=1e-5)

    print("KERNEL_OK")
</pallas_src>

<mosaic_0001>
module attributes {stable_mosaic.version = 11 : i64} {
  func.func @_softmax_kernel(%arg0: i32, %arg1: memref<16x128xbf16, #tpu.memory_space<vmem>>, %arg2: memref<16x128xf32, #tpu.memory_space<vmem>>) attributes {dimension_semantics = [#tpu.dimension_semantics<parallel>], iteration_bounds = array<i64: 1>, scalar_prefetch = 0 : i64, scratch_operands = 0 : i64, tpu.core_type = #tpu.core_type<tc>, window_params = [{transform_indices = @transform_0, window_bounds = array<i64: 16, 128>}, {transform_indices = @transform_1, window_bounds = array<i64: 16, 128>}]} {
    %c0 = arith.constant 0 : index
    %c0_0 = arith.constant 0 : index
    %0 = vector.load %arg1[%c0, %c0_0] : memref<16x128xbf16, #tpu.memory_space<vmem>>, vector<16x128xbf16>
    %1 = arith.extf %0 : vector<16x128xbf16> to vector<16x128xf32>
    %cst = arith.constant dense<0xFF800000> : vector<16xf32>
    %2 = vector.multi_reduction <maximumf>, %1, %cst [1] : vector<16x128xf32> to vector<16xf32>
    %3 = vector.shape_cast %2 : vector<16xf32> to vector<16x1xf32>
    %4 = vector.broadcast %3 : vector<16x1xf32> to vector<16x128xf32>
    %5 = arith.subf %1, %4 : vector<16x128xf32>
    %6 = math.exp %5 : vector<16x128xf32>
    %cst_1 = arith.constant dense<0.000000e+00> : vector<16xf32>
    %7 = vector.multi_reduction <add>, %6, %cst_1 [1] : vector<16x128xf32> to vector<16xf32>
    %8 = vector.shape_cast %7 : vector<16xf32> to vector<16x1xf32>
    %9 = tpu.reciprocal %8 : vector<16x1xf32> -> vector<16x1xf32>
    %10 = vector.broadcast %9 : vector<16x1xf32> to vector<16x128xf32>
    %11 = arith.mulf %6, %10 : vector<16x128xf32>
    %c0_2 = arith.constant 0 : index
    %c0_3 = arith.constant 0 : index
    %12 = vector.load %arg2[%c0_2, %c0_3] : memref<16x128xf32, #tpu.memory_space<vmem>>, vector<16x128xf32>
    tpu.vector_store %arg2[%c0_2, %c0_3], %11 {strides = array<i32>} : memref<16x128xf32, #tpu.memory_space<vmem>>, vector<16x128xf32>,
    return
  }
  func.func @transform_0(%arg0: i32) -> (i32, i32) {
    %c0_i32 = arith.constant 0 : i32
    %c0_i32_0 = arith.constant 0 : i32
    return %arg0, %c0_i32 : i32, i32
  }
  func.func @transform_1(%arg0: i32) -> (i32, i32) {
    %c0_i32 = arith.constant 0 : i32
    %c0_i32_0 = arith.constant 0 : i32
    return %arg0, %c0_i32 : i32, i32
  }
}

</mosaic_0001>

<llo_original>
// kernel: tpu_custom_call.1
$region0: #{tpu_custom_call.1}
  #allocation0 [shape = 'u32[]', space=smem, size = 0x4, offset = 0x4, fixed_abs, tag = 'smem constant byte address 0x4 - core index']
  #allocation1 [shape = 'u32[144,128]{1,0:T(1,128)}', space=vmem, size = 0x12000, scoped, tag = 'internal scratch']
  %s0 = inlined_call_operand.hbm [shape: bf16[16,128], index: 0, kind: input, shape index: {}]
  %s1 = inlined_call_operand.hbm [shape: f32[16,128], index: 1, kind: output, shape index: {}]
  %s2 = sld [smem:[#allocation0]]
  $region18: #{tpu_custom_call.1} parent=0
    _
  %s4 = ssub.s32 1, %s2
  %s5 = scalar_select 0, %s4, %s2
  $region1: #{tpu_custom_call.1} parent=0
    #allocation2 [shape = 'u8[4096]{0}', space=vmem, size = 0x1000, scoped, tag = 'input window, operand 0, single buffered']
    #allocation3 [shape = 's32[1]{0}', space=sflag, size = 0x4, scoped, tag = 'scoped memory for tpu_custom_call.1']
    #allocation4 [shape = 's32[1]{0}', space=sflag, size = 0x4, scoped, tag = 'scoped memory for tpu_custom_call.1']
    #allocation5 [shape = 'u8[8192]{0}', space=vmem, size = 0x2000, scoped, tag = 'output window, operand 0, single buffered']
    %6 = vsyncpa [#allocation3], 0
    %7 = vsyncpa [#allocation4], 0
    // Predicated region
    $region2: #{tpu_custom_call.1} parent=1 // pred_check
      _
    $region3: #{tpu_custom_call.1} parent=1 // pred_check_branch
      %9 = sbr.rel (0) target = $region5
    $region4: #{tpu_custom_call.1} parent=1 // pred_region
      %s11 = ssub.s32 128, 128
      %12 = vsyncadd [#allocation3], %s11
      %s13 = sshll.u32 [#allocation2], 4
      %s14 = int_to_ptr.vmem [resolvable:$true] %s13
      %19 = dma.hbm_to_vmem [thread:$0]  %s0, 128, %s14, [#allocation3], 64, 64, 4
    $region5: #{tpu_custom_call.1} parent=1 // pred_fallthru
      _
    // Predicated region
    $region6: #{tpu_custom_call.1} parent=1 // pred_check
      _
    $region7: #{tpu_custom_call.1} parent=1 // pred_check_branch
      %21 = sbr.rel (0) target = $region9
    $region8: #{tpu_custom_call.1} parent=1 // pred_region
      %22 = dma.done [#allocation3], 128
    $region9: #{tpu_custom_call.1} parent=1 // pred_fallthru
      _
    %v23 = vld [vmem:[#allocation2] sm:$0xf]
    %v24 = vld [vmem:[#allocation2 + $0x4] sm:$0xf]
    %v25 = vunpack.c.l.bf16 %v23
    %v26 = vunpack.c.l.bf16 %v24
    %27 = vmax.xlane.f32.xlu0 %v25
    %v28 = vpop.xlane.xlu0 %27
    %29 = vmax.xlane.f32.xlu0 %v26
    %v30 = vpop.xlane.xlu0 %29
    %v31 = vsub.f32 %v25, %v28
    %v32 = vsub.f32 %v26, %v30
    %v33 = vmul.f32 %v31, 1.442695
    %v34 = vpow.pop %v33
    %v35 = vmul.f32 %v32, 1.442695
    %v36 = vpow.pop %v35
    %37 = vadd.xlane.f32.xlu0 %v34
    %v38 = vpop.xlane.xlu0 %37
    %39 = vadd.xlane.f32.xlu0 %v36
    %v40 = vpop.xlane.xlu0 %39
    %v41 = vrcp.pop %v38
    %v42 = vrcp.pop %v40
    %v43 = vmul.f32 %v34, %v41
    %v44 = vmul.f32 %v36, %v42
    %45 = vst [vmem:[#allocation5] sm:$0xff] %v43
    %46 = vst [vmem:[#allocation5 + $0x8] sm:$0xff] %v44
    // Predicated region
    $region10: #{tpu_custom_call.1} parent=1 // pred_check
      _
    $region11: #{tpu_custom_call.1} parent=1 // pred_check_branch
      %48 = sbr.rel (0) target = $region13
    $region12: #{tpu_custom_call.1} parent=1 // pred_region
      %s50 = ssub.s32 256, 256
      %51 = vsyncadd [#allocation4], %s50
      %s52 = sshll.u32 [#allocation5], 4
      %s53 = int_to_ptr.vmem [resolvable:$true] %s52
      %58 = dma.vmem_to_hbm [thread:$0]  %s53, 256, %s1, [#allocation4], 128, 128, 8
    $region13: #{tpu_custom_call.1} parent=1 // pred_fallthru
      _
    // Predicated region
    $region14: #{tpu_custom_call.1} parent=1 // pred_check
      _
    $region15: #{tpu_custom_call.1} parent=1 // pred_check_branch
      %60 = sbr.rel (0) target = $region17
    $region16: #{tpu_custom_call.1} parent=1 // pred_region
      %61 = dma.done [#allocation4], 256
    $region17: #{tpu_custom_call.1} parent=1 // pred_fallthru
      _
    %62 = vsyncpa [#allocation3], 1
    %63 = vsyncpa [#allocation4], 1

</llo_original>
